<compile_context>
chip_gen: v5e
topology: v5e:2x2
jax: 0.10.0
libtpu: 0.0.40
codegen_flags: <defaults>
</compile_context>

<pallas_src>
import jax
import jax.numpy as jnp
from jax.experimental import pallas as pl
from jax.experimental.pallas import tpu as pltpu


def _round_up(n, m):
    return ((n + m - 1) // m) * m


def _cdiv(a, b):
    return -(-a // b)


def _disc_kernel(x_ref, w1_ref, b1_ref, w2_ref, b2_ref, w3_ref, b3_ref, o_ref):
    # In-kernel f32 -> bf16 cast (one cheap VPU pass, overlapped with the
    # next tile's DMA) instead of a separate wrapper-side HBM pass.
    x_bf = x_ref[...].astype(jnp.bfloat16)

    # Layer 1: (tb, 64) @ (64, 64) -- bf16 inputs on the MXU, f32 accumulation.
    h1 = jnp.dot(x_bf, w1_ref[...], preferred_element_type=jnp.float32)
    # f32 epilogue (portable: v5e has no bf16 VPU); relu + cast fuse.
    h1 = jnp.maximum(h1 + b1_ref[...], 0.0).astype(jnp.bfloat16)

    # Layer 2: (tb, 64) @ (64, 16).
    h2 = jnp.dot(h1, w2_ref[...], preferred_element_type=jnp.float32)
    h2 = jnp.maximum(h2 + b2_ref[...], 0.0)

    # Layer 3: (tb, 16) . (16,) -> (tb,) as VPU multiply + lane-axis reduce.
    # b3 is an SMEM scalar.
    # TODO(synk): verify in a bundle dump that the (tb,) logits do not trigger
    # a per-tile sublane->lane relayout chain; restructure the reduce if so.
    logits = jnp.sum(h2 * w3_ref[...], axis=-1) + b3_ref[0]          # (tb,)
    probs = jax.nn.sigmoid(logits)

    # Lane-dense store: (1, 1, tb) with the batch tile on the lane axis.
    o_ref[...] = probs.reshape(o_ref.shape).astype(o_ref.dtype)


def discriminator_forward(x, params, *, block_b=8192):
    """Forward pass.  x: (B, 64) float32 -> (B, 1) float32 probabilities."""
    B, F = x.shape
    assert F == 64

    # Batch tile: multiple of 128 (keeps the (1,1,tb) output store unmasked),
    # capped by block_b, and sized so that B > one tile yields >= 2 tiles
    # (feeds both TensorCores on v7x via the "parallel" grid axis).
    tb = min(_round_up(block_b, 128), _round_up(_cdiv(B, 2), 128))
    tb = max(tb, 128)
    num_tiles = _cdiv(B, tb)          # last tile may be ragged -- no padding
    b_pad = num_tiles * tb

    # One-time casts of the tiny weights (VMEM-resident across all tiles).
    w1 = params["w1"].astype(jnp.bfloat16)                  # (64, 64)
    w2 = params["w2"].astype(jnp.bfloat16)                  # (64, 16)
    b1 = params["b1"].reshape(1, 64).astype(jnp.float32)
    b2 = params["b2"].reshape(1, 16).astype(jnp.float32)
    w3 = params["w3"].reshape(1, 16).astype(jnp.float32)    # row vector
    b3 = params["b3"].reshape(1).astype(jnp.float32)        # SMEM scalar

    out = pl.pallas_call(
        _disc_kernel,
        out_shape=jax.ShapeDtypeStruct((num_tiles, 1, tb), jnp.float32),
        grid=(num_tiles,),
        in_specs=[
            pl.BlockSpec((tb, 64), lambda i: (i, 0)),             # x tile (f32)
            pl.BlockSpec((64, 64), lambda i: (0, 0)),             # w1 (resident)
            pl.BlockSpec((1, 64), lambda i: (0, 0)),              # b1
            pl.BlockSpec((64, 16), lambda i: (0, 0)),             # w2
            pl.BlockSpec((1, 16), lambda i: (0, 0)),              # b2
            pl.BlockSpec((1, 16), lambda i: (0, 0)),              # w3 row
            pl.BlockSpec(memory_space=pltpu.MemorySpace.SMEM),    # b3 scalar
        ],
        out_specs=pl.BlockSpec((1, 1, tb), lambda i: (i, 0, 0)),
        compiler_params=pltpu.CompilerParams(
            # Batch tiles are independent -> megacore sharding on v7x.
            dimension_semantics=("parallel",),
            # Raise v5e's 16 MiB scoped-VMEM default; matches v6e/v7x defaults.
            vmem_limit_bytes=32 * 1024 * 1024,
        ),
    )(x, w1, b1, w2, b2, w3, b3)

    # Lane-major (num_tiles, 1, tb) is contiguous in row order; rows past B in
    # the ragged last tile are garbage (undefined partial-block reads) and are
    # sliced off here.  The final (B, 1) reshape matches the module's output.
    return out.reshape(b_pad)[:B].reshape(B, 1)


def init_params(key):
    """Deterministic init matching PyTorch nn.Linear default:
    U(-1/sqrt(fan_in), 1/sqrt(fan_in)) for both weight and bias."""
    ks = jax.random.split(key, 6)

    def linear(kw, kb, fan_in, fan_out):
        bound = 1.0 / jnp.sqrt(jnp.float32(fan_in))
        w = jax.random.uniform(kw, (fan_in, fan_out), jnp.float32, -bound, bound)
        b = jax.random.uniform(kb, (1, fan_out), jnp.float32, -bound, bound)
        return w, b

    w1, b1 = linear(ks[0], ks[1], 64, 64)
    w2, b2 = linear(ks[2], ks[3], 64, 16)
    w3, b3 = linear(ks[4], ks[5], 16, 1)
    return {"w1": w1, "b1": b1, "w2": w2, "b2": b2, "w3": w3, "b3": b3}


if __name__ == "__main__":
    key = jax.random.PRNGKey(0)
    k_x, k_p = jax.random.split(key)
    params = init_params(k_p)

    def ref_forward(x):
        h1 = jnp.maximum(x @ params["w1"] + params["b1"], 0.0)
        h2 = jnp.maximum(h1 @ params["w2"] + params["b2"], 0.0)
        return jax.nn.sigmoid(h2 @ params["w3"] + params["b3"])

    # (B, block_b):
    #   B=8   : single partial tile (B < 128)
    #   B=13  : single partial tile, odd row count
    #   B=256 : two exact tiles (multi-tile grid, both TCs on v7x)
    #   B=300 : multi-tile grid with a ragged last tile (no-pad path)
    for B, blk in ((8, 8192), (13, 8192), (256, 128), (300, 128)):
        x = jax.random.normal(jax.random.fold_in(k_x, B), (B, 64), jnp.float32)
        out = jax.block_until_ready(discriminator_forward(x, params, block_b=blk))
        ref = ref_forward(x)
        assert out.shape == (B, 1)
        # bf16 matmul inputs -> relaxed tolerance vs. the f32 reference.
        assert jnp.allclose(out, ref, atol=2e-2), f"mismatch vs reference at B={B}"

    print("KERNEL_OK")
</pallas_src>

<mosaic_0001>
module attributes {stable_mosaic.version = 11 : i64} {
  func.func @_disc_kernel(%arg0: i32, %arg1: memref<128x64xf32, #tpu.memory_space<vmem>>, %arg2: memref<64x64xbf16, #tpu.memory_space<vmem>>, %arg3: memref<1x64xf32, #tpu.memory_space<vmem>>, %arg4: memref<64x16xbf16, #tpu.memory_space<vmem>>, %arg5: memref<1x16xf32, #tpu.memory_space<vmem>>, %arg6: memref<1x16xf32, #tpu.memory_space<vmem>>, %arg7: memref<1xf32, #tpu.memory_space<smem>>, %arg8: memref<1x1x128xf32, #tpu.memory_space<vmem>>) attributes {dimension_semantics = [#tpu.dimension_semantics<parallel>], iteration_bounds = array<i64: 1>, scalar_prefetch = 0 : i64, scratch_operands = 0 : i64, tpu.core_type = #tpu.core_type<tc>, window_params = [{transform_indices = @transform_0, window_bounds = array<i64: 128, 64>}, {pipeline_mode = #tpu.pipeline_mode<synchronous>, transform_indices = @transform_1, window_bounds = array<i64: 64, 64>}, {pipeline_mode = #tpu.pipeline_mode<synchronous>, transform_indices = @transform_2, window_bounds = array<i64: 1, 64>}, {pipeline_mode = #tpu.pipeline_mode<synchronous>, transform_indices = @transform_3, window_bounds = array<i64: 64, 16>}, {pipeline_mode = #tpu.pipeline_mode<synchronous>, transform_indices = @transform_4, window_bounds = array<i64: 1, 16>}, {pipeline_mode = #tpu.pipeline_mode<synchronous>, transform_indices = @transform_5, window_bounds = array<i64: 1, 16>}, {transform_indices = @transform_6, window_bounds = array<i64: 1>}, {transform_indices = @transform_7, window_bounds = array<i64: 1, 1, 128>}]} {
    %c0 = arith.constant 0 : index
    %c0_0 = arith.constant 0 : index
    %0 = vector.load %arg1[%c0, %c0_0] : memref<128x64xf32, #tpu.memory_space<vmem>>, vector<128x64xf32>
    %1 = arith.truncf %0 : vector<128x64xf32> to vector<128x64xbf16>
    %c0_1 = arith.constant 0 : index
    %c0_2 = arith.constant 0 : index
    %2 = vector.load %arg2[%c0_1, %c0_2] : memref<64x64xbf16, #tpu.memory_space<vmem>>, vector<64x64xbf16>
    %cst = arith.constant dense<0.000000e+00> : vector<128x64xf32>
    %3 = tpu.matmul %1, %2, %cst {dimension_numbers = #tpu.dot_dimension_numbers<[1], [0], [0], [1], [0, 0, 1, 1], [], []>} : vector<128x64xbf16>, vector<64x64xbf16>, vector<128x64xf32> -> vector<128x64xf32>
    %c0_3 = arith.constant 0 : index
    %c0_4 = arith.constant 0 : index
    %4 = vector.load %arg3[%c0_3, %c0_4] : memref<1x64xf32, #tpu.memory_space<vmem>>, vector<1x64xf32>
    %5 = vector.broadcast %4 : vector<1x64xf32> to vector<128x64xf32>
    %6 = arith.addf %3, %5 : vector<128x64xf32>
    %cst_5 = arith.constant 0.000000e+00 : f32
    %7 = vector.broadcast %cst_5 : f32 to vector<128x64xf32>
    %8 = arith.maximumf %6, %7 : vector<128x64xf32>
    %9 = arith.truncf %8 : vector<128x64xf32> to vector<128x64xbf16>
    %c0_6 = arith.constant 0 : index
    %c0_7 = arith.constant 0 : index
    %10 = vector.load %arg4[%c0_6, %c0_7] : memref<64x16xbf16, #tpu.memory_space<vmem>>, vector<64x16xbf16>
    %cst_8 = arith.constant dense<0.000000e+00> : vector<128x16xf32>
    %11 = tpu.matmul %9, %10, %cst_8 {dimension_numbers = #tpu.dot_dimension_numbers<[1], [0], [0], [1], [0, 0, 1, 1], [], []>} : vector<128x64xbf16>, vector<64x16xbf16>, vector<128x16xf32> -> vector<128x16xf32>
    %c0_9 = arith.constant 0 : index
    %c0_10 = arith.constant 0 : index
    %12 = vector.load %arg5[%c0_9, %c0_10] : memref<1x16xf32, #tpu.memory_space<vmem>>, vector<1x16xf32>
    %13 = vector.broadcast %12 : vector<1x16xf32> to vector<128x16xf32>
    %14 = arith.addf %11, %13 : vector<128x16xf32>
    %cst_11 = arith.constant 0.000000e+00 : f32
    %15 = vector.broadcast %cst_11 : f32 to vector<128x16xf32>
    %16 = arith.maximumf %14, %15 : vector<128x16xf32>
    %c0_12 = arith.constant 0 : index
    %c0_13 = arith.constant 0 : index
    %17 = vector.load %arg6[%c0_12, %c0_13] : memref<1x16xf32, #tpu.memory_space<vmem>>, vector<1x16xf32>
    %18 = vector.broadcast %17 : vector<1x16xf32> to vector<128x16xf32>
    %19 = arith.mulf %16, %18 : vector<128x16xf32>
    %cst_14 = arith.constant dense<0.000000e+00> : vector<128xf32>
    %20 = vector.multi_reduction <add>, %19, %cst_14 [1] : vector<128x16xf32> to vector<128xf32>
    %c0_15 = arith.constant 0 : index
    %21 = memref.load %arg7[%c0_15] : memref<1xf32, #tpu.memory_space<smem>>
    %22 = vector.broadcast %21 : f32 to vector<128xf32>
    %23 = arith.addf %20, %22 : vector<128xf32>
    %24 = arith.negf %23 : vector<128xf32>
    %25 = math.exp %24 : vector<128xf32>
    %cst_16 = arith.constant 1.000000e+00 : f32
    %26 = vector.broadcast %cst_16 : f32 to vector<128xf32>
    %27 = arith.addf %26, %25 : vector<128xf32>
    %28 = arith.divf %26, %27 : vector<128xf32>
    %29 = vector.shape_cast %28 : vector<128xf32> to vector<1x1x128xf32>
    %c0_17 = arith.constant 0 : index
    %c0_18 = arith.constant 0 : index
    %c0_19 = arith.constant 0 : index
    %30 = vector.load %arg8[%c0_17, %c0_18, %c0_19] : memref<1x1x128xf32, #tpu.memory_space<vmem>>, vector<1x1x128xf32>
    tpu.vector_store %arg8[%c0_17, %c0_18, %c0_19], %29 {strides = array<i32>} : memref<1x1x128xf32, #tpu.memory_space<vmem>>, vector<1x1x128xf32>,
    return
  }
  func.func @transform_0(%arg0: i32) -> (i32, i32) {
    %c0_i32 = arith.constant 0 : i32
    %c0_i32_0 = arith.constant 0 : i32
    return %arg0, %c0_i32 : i32, i32
  }
  func.func @transform_1(%arg0: i32) -> (i32, i32) {
    %c0_i32 = arith.constant 0 : i32
    %c0_i32_0 = arith.constant 0 : i32
    %c0_i32_1 = arith.constant 0 : i32
    return %c0_i32, %c0_i32_0 : i32, i32
  }
  func.func @transform_2(%arg0: i32) -> (i32, i32) {
    %c0_i32 = arith.constant 0 : i32
    %c0_i32_0 = arith.constant 0 : i32
    %c0_i32_1 = arith.constant 0 : i32
    return %c0_i32, %c0_i32_0 : i32, i32
  }
  func.func @transform_3(%arg0: i32) -> (i32, i32) {
    %c0_i32 = arith.constant 0 : i32
    %c0_i32_0 = arith.constant 0 : i32
    %c0_i32_1 = arith.constant 0 : i32
    return %c0_i32, %c0_i32_0 : i32, i32
  }
  func.func @transform_4(%arg0: i32) -> (i32, i32) {
    %c0_i32 = arith.constant 0 : i32
    %c0_i32_0 = arith.constant 0 : i32
    %c0_i32_1 = arith.constant 0 : i32
    return %c0_i32, %c0_i32_0 : i32, i32
  }
  func.func @transform_5(%arg0: i32) -> (i32, i32) {
    %c0_i32 = arith.constant 0 : i32
    %c0_i32_0 = arith.constant 0 : i32
    %c0_i32_1 = arith.constant 0 : i32
    return %c0_i32, %c0_i32_0 : i32, i32
  }
  func.func @transform_6(%arg0: i32) -> i32 {
    %c0_i32 = arith.constant 0 : i32
    %c0_i32_0 = arith.constant 0 : i32
    return %c0_i32 : i32
  }
  func.func @transform_7(%arg0: i32) -> (i32, i32, i32) {
    %c0_i32 = arith.constant 0 : i32
    %c0_i32_0 = arith.constant 0 : i32
    %c0_i32_1 = arith.constant 0 : i32
    return %arg0, %c0_i32, %c0_i32_0 : i32, i32, i32
  }
}

</mosaic_0001>

<llo_original>
// kernel: tpu_custom_call.1
$region0: #{tpu_custom_call.1}
  #allocation0 [shape = 'u32[]', space=smem, size = 0x4, offset = 0x4, fixed_abs, tag = 'smem constant byte address 0x4 - core index']
  #allocation1 [shape = 'u32[72,128]{1,0:T(1,128)}', space=vmem, size = 0x9000, scoped, tag = 'internal scratch']
  #allocation2 [shape = 'f32[1]{0:T(128)S(6)}', space=smem, size = 0x200, scoped, tag = 'scoped memory for tpu_custom_call.1']
  %s0 = inlined_call_operand.vmem [shape: f32[8,64], index: 0, kind: input, shape index: {}]
  %s1 = inlined_call_operand.vmem [shape: bf16[64,64], index: 1, kind: input, shape index: {}]
  %s2 = inlined_call_operand.vmem [shape: f32[1,64], index: 2, kind: input, shape index: {}]
  %s3 = inlined_call_operand.vmem [shape: bf16[64,16], index: 3, kind: input, shape index: {}]
  %s4 = inlined_call_operand.vmem [shape: f32[1,16], index: 4, kind: input, shape index: {}]
  %s5 = inlined_call_operand.vmem [shape: f32[1,16], index: 5, kind: input, shape index: {}]
  %s6 = inlined_call_operand.<no memory space> [shape: f32[1], index: 6, kind: input, shape index: {}]
  %s7 = inlined_call_operand.hbm [shape: f32[1,1,128], index: 7, kind: output, shape index: {}]
  %s8 = sld [smem:[#allocation0]]
  $region38: #{tpu_custom_call.1} parent=0
    _
  %s10 = ssub.s32 1, %s8
  %s11 = scalar_select 0, %s10, %s8
  %12 = sst [smem:[#allocation2]] %s6
  $region1: #{tpu_custom_call.1} parent=0
    #allocation3 [shape = 'u8[512]{0}', space=vmem, size = 0x400, scoped, tag = 'output window, operand 0, single buffered']
    #allocation4 [shape = 's32[1]{0}', space=sflag, size = 0x4, scoped, tag = 'scoped memory for tpu_custom_call.1']
    %13 = vsyncpa [#allocation4], 0
    // Predicated region
    $region2: #{tpu_custom_call.1} parent=1 // pred_check
      _
    $region3: #{tpu_custom_call.1} parent=1 // pred_check_branch
      %15 = sbr.rel (0) target = $region5
    $region4: #{tpu_custom_call.1} parent=1 // pred_region
      _
    $region5: #{tpu_custom_call.1} parent=1 // pred_fallthru
      _
    // Predicated region
    $region6: #{tpu_custom_call.1} parent=1 // pred_check
      _
    $region7: #{tpu_custom_call.1} parent=1 // pred_check_branch
      %17 = sbr.rel (0) target = $region9
    $region8: #{tpu_custom_call.1} parent=1 // pred_region
      _
    $region9: #{tpu_custom_call.1} parent=1 // pred_fallthru
      _
    // Predicated region
    $region10: #{tpu_custom_call.1} parent=1 // pred_check
      _
    $region11: #{tpu_custom_call.1} parent=1 // pred_check_branch
      %19 = sbr.rel (0) target = $region13
    $region12: #{tpu_custom_call.1} parent=1 // pred_region
      _
    $region13: #{tpu_custom_call.1} parent=1 // pred_fallthru
      _
    // Predicated region
    $region14: #{tpu_custom_call.1} parent=1 // pred_check
      _
    $region15: #{tpu_custom_call.1} parent=1 // pred_check_branch
      %21 = sbr.rel (0) target = $region17
    $region16: #{tpu_custom_call.1} parent=1 // pred_region
      _
    $region17: #{tpu_custom_call.1} parent=1 // pred_fallthru
      _
    // Predicated region
    $region18: #{tpu_custom_call.1} parent=1 // pred_check
      _
    $region19: #{tpu_custom_call.1} parent=1 // pred_check_branch
      %23 = sbr.rel (0) target = $region21
    $region20: #{tpu_custom_call.1} parent=1 // pred_region
      _
    $region21: #{tpu_custom_call.1} parent=1 // pred_fallthru
      _
    // Predicated region
    $region22: #{tpu_custom_call.1} parent=1 // pred_check
      _
    $region23: #{tpu_custom_call.1} parent=1 // pred_check_branch
      %25 = sbr.rel (0) target = $region25
    $region24: #{tpu_custom_call.1} parent=1 // pred_region
      _
    $region25: #{tpu_custom_call.1} parent=1 // pred_fallthru
      _
    // Predicated region
    $region26: #{tpu_custom_call.1} parent=1 // pred_check
      _
    $region27: #{tpu_custom_call.1} parent=1 // pred_check_branch
      %27 = sbr.rel (0) target = $region29
    $region28: #{tpu_custom_call.1} parent=1 // pred_region
      _
    $region29: #{tpu_custom_call.1} parent=1 // pred_fallthru
      _
    %v29 = vld [vmem:[%s0] sm:$0xff]
    %v30 = vld [vmem:[%s0 + $0x8] sm:$0xff]
    %v31 = vld [vmem:[%s0 + $0x10] sm:$0xff]
    %v32 = vld [vmem:[%s0 + $0x18] sm:$0xff]
    %v33 = vld [vmem:[%s0 + $0x20] sm:$0xff]
    %v34 = vld [vmem:[%s0 + $0x28] sm:$0xff]
    %v35 = vld [vmem:[%s0 + $0x30] sm:$0xff]
    %v36 = vld [vmem:[%s0 + $0x38] sm:$0xff]
    %v37 = vld [vmem:[%s0 + $0x40] sm:$0xff]
    %v38 = vld [vmem:[%s0 + $0x48] sm:$0xff]
    %v39 = vld [vmem:[%s0 + $0x50] sm:$0xff]
    %v40 = vld [vmem:[%s0 + $0x58] sm:$0xff]
    %v41 = vld [vmem:[%s0 + $0x60] sm:$0xff]
    %v42 = vld [vmem:[%s0 + $0x68] sm:$0xff]
    %v43 = vld [vmem:[%s0 + $0x70] sm:$0xff]
    %v44 = vld [vmem:[%s0 + $0x78] sm:$0xff]
    %v45 = vpack.c.bf16 %v30, %v29
    %v46 = vpack.c.bf16 %v32, %v31
    %v47 = vpack.c.bf16 %v34, %v33
    %v48 = vpack.c.bf16 %v36, %v35
    %v49 = vpack.c.bf16 %v38, %v37
    %v50 = vpack.c.bf16 %v40, %v39
    %v51 = vpack.c.bf16 %v42, %v41
    %v52 = vpack.c.bf16 %v44, %v43
    %v53 = vld [vmem:[%s1] sm:$0xf]
    %v54 = vld [vmem:[%s1 + $0x4] sm:$0xf]
    %v55 = vld [vmem:[%s1 + $0x8] sm:$0xf]
    %v56 = vld [vmem:[%s1 + $0xc] sm:$0xf]
    %v57 = vld [vmem:[%s1 + $0x10] sm:$0xf]
    %v58 = vld [vmem:[%s1 + $0x14] sm:$0xf]
    %v59 = vld [vmem:[%s1 + $0x18] sm:$0xf]
    %v60 = vld [vmem:[%s1 + $0x1c] sm:$0xf]
    %v61 = vld [vmem:[%s2] sm:$0x1]
    %v63 = vperm.slane %v61, 0
    %v73 = vunpack.c.l.b16 %v53
    %v74 = vunpack.c.l.b16 %v54
    %v75 = vunpack.c.l.b16 %v55
    %v76 = vunpack.c.l.b16 %v56
    %v77 = vunpack.c.l.b16 %v57
    %v78 = vunpack.c.l.b16 %v58
    %v79 = vunpack.c.l.b16 %v59
    %v80 = vunpack.c.l.b16 %v60
    %v81 = vpack.c.b16 %v74, %v73
    %v82 = vpack.c.b16 %v76, %v75
    %v83 = vpack.c.b16 %v78, %v77
    %v84 = vpack.c.b16 %v80, %v79
    %vm89 = vcmask 523264
    %v91 = vsel %vm89, %v45, 0
    %v94 = vsel %vm89, %v46, 0
    %v97 = vsel %vm89, %v47, 0
    %v100 = vsel %vm89, %v48, 0
    %v103 = vsel %vm89, %v49, 0
    %v106 = vsel %vm89, %v50, 0
    %v109 = vsel %vm89, %v51, 0
    %v112 = vsel %vm89, %v52, 0
    %114 = vmatpush.bf16.msra.mxu0 0
    %115 = vmatpush.bf16.msra.mxu0 0
    %116 = vmatpush.bf16.msra.mxu0 0
    %117 = vmatpush.bf16.msra.mxu0 0
    %118 = vmatpush.bf16.msra.mxu0 %v84
    %119 = vmatpush.bf16.msra.mxu0 %v83
    %120 = vmatpush.bf16.msra.mxu0 %v82
    %121 = vmatpush.bf16.msra.mxu0 %v81
    %122 = vmatmul.bf16.gmra.mxu0 %v91
    %v123 = vpop.f32.mrf.mxu0
    %v124 = vadd.f32 %v63, %v123
    %v125 = vpop.f32.mrf.mxu0
    %v126 = vadd.f32 %v63, %v125
    %127 = vmatmul.bf16.gmra.mxu0 %v94
    %v128 = vpop.f32.mrf.mxu0
    %v129 = vadd.f32 %v63, %v128
    %v130 = vpop.f32.mrf.mxu0
    %v131 = vadd.f32 %v63, %v130
    %132 = vmatmul.bf16.gmra.mxu0 %v97
    %v133 = vpop.f32.mrf.mxu0
    %v134 = vadd.f32 %v63, %v133
    %v135 = vpop.f32.mrf.mxu0
    %v136 = vadd.f32 %v63, %v135
    %137 = vmatmul.bf16.gmra.mxu0 %v100
    %v138 = vpop.f32.mrf.mxu0
    %v139 = vadd.f32 %v63, %v138
    %v140 = vpop.f32.mrf.mxu0
    %v141 = vadd.f32 %v63, %v140
    %142 = vmatmul.bf16.gmra.mxu0 %v103
    %v143 = vpop.f32.mrf.mxu0
    %v144 = vadd.f32 %v63, %v143
    %v145 = vpop.f32.mrf.mxu0
    %v146 = vadd.f32 %v63, %v145
    %147 = vmatmul.bf16.gmra.mxu0 %v106
    %v148 = vpop.f32.mrf.mxu0
    %v149 = vadd.f32 %v63, %v148
    %v150 = vpop.f32.mrf.mxu0
    %v151 = vadd.f32 %v63, %v150
    %152 = vmatmul.bf16.gmra.mxu0 %v109
    %v153 = vpop.f32.mrf.mxu0
    %v154 = vadd.f32 %v63, %v153
    %v155 = vpop.f32.mrf.mxu0
    %v156 = vadd.f32 %v63, %v155
    %157 = vmatmul.bf16.gmra.mxu0 %v112
    %v158 = vpop.f32.mrf.mxu0
    %v159 = vadd.f32 %v63, %v158
    %v160 = vpop.f32.mrf.mxu0
    %v161 = vadd.f32 %v63, %v160
    %162 = vdwg.mxu0
    %v163 = vmax.f32 %v124, 0.0
    %v164 = vmax.f32 %v126, 0.0
    %v165 = vmax.f32 %v129, 0.0
    %v166 = vmax.f32 %v131, 0.0
    %v167 = vmax.f32 %v134, 0.0
    %v168 = vmax.f32 %v136, 0.0
    %v169 = vmax.f32 %v139, 0.0
    %v170 = vmax.f32 %v141, 0.0
    %v171 = vmax.f32 %v144, 0.0
    %v172 = vmax.f32 %v146, 0.0
    %v173 = vmax.f32 %v149, 0.0
    %v174 = vmax.f32 %v151, 0.0
    %v175 = vmax.f32 %v154, 0.0
    %v176 = vmax.f32 %v156, 0.0
    %v177 = vmax.f32 %v159, 0.0
    %v178 = vmax.f32 %v161, 0.0
    %v179 = vpack.c.bf16 %v164, %v163
    %v180 = vpack.c.bf16 %v166, %v165
    %v181 = vpack.c.bf16 %v168, %v167
    %v182 = vpack.c.bf16 %v170, %v169
    %v183 = vpack.c.bf16 %v172, %v171
    %v184 = vpack.c.bf16 %v174, %v173
    %v185 = vpack.c.bf16 %v176, %v175
    %v186 = vpack.c.bf16 %v178, %v177
    %v187 = vld [vmem:[%s3] sm:$0xf]
    %v188 = vld [vmem:[%s3 + $0x4] sm:$0xf]
    %v189 = vld [vmem:[%s3 + $0x8] sm:$0xf]
    %v190 = vld [vmem:[%s3 + $0xc] sm:$0xf]
    %v191 = vld [vmem:[%s3 + $0x10] sm:$0xf]
    %v192 = vld [vmem:[%s3 + $0x14] sm:$0xf]
    %v193 = vld [vmem:[%s3 + $0x18] sm:$0xf]
    %v194 = vld [vmem:[%s3 + $0x1c] sm:$0xf]
    %v195 = vld [vmem:[%s4] sm:$0x1]
    %v197 = vperm.slane %v195, 0
    %v207 = vunpack.c.l.b16 %v187
    %v208 = vunpack.c.l.b16 %v188
    %v209 = vunpack.c.l.b16 %v189
    %v210 = vunpack.c.l.b16 %v190
    %v211 = vunpack.c.l.b16 %v191
    %v212 = vunpack.c.l.b16 %v192
    %v213 = vunpack.c.l.b16 %v193
    %v214 = vunpack.c.l.b16 %v194
    %v215 = vpack.c.b16 %v208, %v207
    %v216 = vpack.c.b16 %v210, %v209
    %v217 = vpack.c.b16 %v212, %v211
    %v218 = vpack.c.b16 %v214, %v213
    %v224 = vsel %vm89, %v179, 0
    %v227 = vsel %vm89, %v180, 0
    %v230 = vsel %vm89, %v181, 0
    %v233 = vsel %vm89, %v182, 0
    %v236 = vsel %vm89, %v183, 0
    %v239 = vsel %vm89, %v184, 0
    %v242 = vsel %vm89, %v185, 0
    %v245 = vsel %vm89, %v186, 0
    %247 = vmatpush.bf16.msra.mxu0 0
    %248 = vmatpush.bf16.msra.mxu0 0
    %249 = vmatpush.bf16.msra.mxu0 0
    %250 = vmatpush.bf16.msra.mxu0 0
    %251 = vmatpush.bf16.msra.mxu0 %v218
    %252 = vmatpush.bf16.msra.mxu0 %v217
    %253 = vmatpush.bf16.msra.mxu0 %v216
    %254 = vmatpush.bf16.msra.mxu0 %v215
    %255 = vmatmul.bf16.gmra.mxu0 %v224
    %v256 = vpop.f32.mrf.mxu0
    %v257 = vadd.f32 %v197, %v256
    %v258 = vpop.f32.mrf.mxu0
    %v259 = vadd.f32 %v197, %v258
    %260 = vmatmul.bf16.gmra.mxu0 %v227
    %v261 = vpop.f32.mrf.mxu0
    %v262 = vadd.f32 %v197, %v261
    %v263 = vpop.f32.mrf.mxu0
    %v264 = vadd.f32 %v197, %v263
    %265 = vmatmul.bf16.gmra.mxu0 %v230
    %v266 = vpop.f32.mrf.mxu0
    %v267 = vadd.f32 %v197, %v266
    %v268 = vpop.f32.mrf.mxu0
    %v269 = vadd.f32 %v197, %v268
    %270 = vmatmul.bf16.gmra.mxu0 %v233
    %v271 = vpop.f32.mrf.mxu0
    %v272 = vadd.f32 %v197, %v271
    %v273 = vpop.f32.mrf.mxu0
    %v274 = vadd.f32 %v197, %v273
    %275 = vmatmul.bf16.gmra.mxu0 %v236
    %v276 = vpop.f32.mrf.mxu0
    %v277 = vadd.f32 %v197, %v276
    %v278 = vpop.f32.mrf.mxu0
    %v279 = vadd.f32 %v197, %v278
    %280 = vmatmul.bf16.gmra.mxu0 %v239
    %v281 = vpop.f32.mrf.mxu0
    %v282 = vadd.f32 %v197, %v281
    %v283 = vpop.f32.mrf.mxu0
    %v284 = vadd.f32 %v197, %v283
    %285 = vmatmul.bf16.gmra.mxu0 %v242
    %v286 = vpop.f32.mrf.mxu0
    %v287 = vadd.f32 %v197, %v286
    %v288 = vpop.f32.mrf.mxu0
    %v289 = vadd.f32 %v197, %v288
    %290 = vmatmul.bf16.gmra.mxu0 %v245
    %v291 = vpop.f32.mrf.mxu0
    %v292 = vadd.f32 %v197, %v291
    %v293 = vpop.f32.mrf.mxu0
    %v294 = vadd.f32 %v197, %v293
    %295 = vdwg.mxu0
    %v296 = vmax.f32 %v257, 0.0
    %v297 = vmax.f32 %v259, 0.0
    %v298 = vmax.f32 %v262, 0.0
    %v299 = vmax.f32 %v264, 0.0
    %v300 = vmax.f32 %v267, 0.0
    %v301 = vmax.f32 %v269, 0.0
    %v302 = vmax.f32 %v272, 0.0
    %v303 = vmax.f32 %v274, 0.0
    %v304 = vmax.f32 %v277, 0.0
    %v305 = vmax.f32 %v279, 0.0
    %v306 = vmax.f32 %v282, 0.0
    %v307 = vmax.f32 %v284, 0.0
    %v308 = vmax.f32 %v287, 0.0
    %v309 = vmax.f32 %v289, 0.0
    %v310 = vmax.f32 %v292, 0.0
    %v311 = vmax.f32 %v294, 0.0
    %v312 = vld [vmem:[%s5] sm:$0x1]
    %v314 = vperm.slane %v312, 0
    %v316 = vmul.f32 %v296, %v314
    %v317 = vmul.f32 %v297, %v314
    %v318 = vmul.f32 %v298, %v314
    %v319 = vmul.f32 %v299, %v314
    %v320 = vmul.f32 %v300, %v314
    %v321 = vmul.f32 %v301, %v314
    %v322 = vmul.f32 %v302, %v314
    %v323 = vmul.f32 %v303, %v314
    %v324 = vmul.f32 %v304, %v314
    %v325 = vmul.f32 %v305, %v314
    %v326 = vmul.f32 %v306, %v314
    %v327 = vmul.f32 %v307, %v314
    %v328 = vmul.f32 %v308, %v314
    %v329 = vmul.f32 %v309, %v314
    %v330 = vmul.f32 %v310, %v314
    %v331 = vmul.f32 %v311, %v314
    %vm332 = vcmask 130048
    %v333 = vsel %vm332, %v316, 0.0
    %334 = vadd.xlane.f32.xlu0 %v333
    %v335 = vpop.xlane.xlu0 %334
    %v336 = vsel %vm332, %v317, 0.0
    %337 = vadd.xlane.f32.xlu0 %v336
    %v338 = vpop.xlane.xlu0 %337
    %v339 = vsel %vm332, %v318, 0.0
    %340 = vadd.xlane.f32.xlu0 %v339
    %v341 = vpop.xlane.xlu0 %340
    %v342 = vsel %vm332, %v319, 0.0
    %343 = vadd.xlane.f32.xlu0 %v342
    %v344 = vpop.xlane.xlu0 %343
    %v345 = vsel %vm332, %v320, 0.0
    %346 = vadd.xlane.f32.xlu0 %v345
    %v347 = vpop.xlane.xlu0 %346
    %v348 = vsel %vm332, %v321, 0.0
    %349 = vadd.xlane.f32.xlu0 %v348
    %v350 = vpop.xlane.xlu0 %349
    %v351 = vsel %vm332, %v322, 0.0
    %352 = vadd.xlane.f32.xlu0 %v351
    %v353 = vpop.xlane.xlu0 %352
    %v354 = vsel %vm332, %v323, 0.0
    %355 = vadd.xlane.f32.xlu0 %v354
    %v356 = vpop.xlane.xlu0 %355
    %v357 = vsel %vm332, %v324, 0.0
    %358 = vadd.xlane.f32.xlu0 %v357
    %v359 = vpop.xlane.xlu0 %358
    %v360 = vsel %vm332, %v325, 0.0
    %361 = vadd.xlane.f32.xlu0 %v360
    %v362 = vpop.xlane.xlu0 %361
    %v363 = vsel %vm332, %v326, 0.0
    %364 = vadd.xlane.f32.xlu0 %v363
    %v365 = vpop.xlane.xlu0 %364
    %v366 = vsel %vm332, %v327, 0.0
    %367 = vadd.xlane.f32.xlu0 %v366
    %v368 = vpop.xlane.xlu0 %367
    %v369 = vsel %vm332, %v328, 0.0
    %370 = vadd.xlane.f32.xlu0 %v369
    %v371 = vpop.xlane.xlu0 %370
    %v372 = vsel %vm332, %v329, 0.0
    %373 = vadd.xlane.f32.xlu0 %v372
    %v374 = vpop.xlane.xlu0 %373
    %v375 = vsel %vm332, %v330, 0.0
    %376 = vadd.xlane.f32.xlu0 %v375
    %v377 = vpop.xlane.xlu0 %376
    %v378 = vsel %vm332, %v331, 0.0
    %379 = vadd.xlane.f32.xlu0 %v378
    %v380 = vpop.xlane.xlu0 %379
    %s381 = sld [smem:[#allocation2]]
    %v382 = vstv %s381
    %v383 = vadd.f32 %v335, %v382
    %v384 = vadd.f32 %v338, %v382
    %v385 = vadd.f32 %v341, %v382
    %v386 = vadd.f32 %v344, %v382
    %v387 = vadd.f32 %v347, %v382
    %v388 = vadd.f32 %v350, %v382
    %v389 = vadd.f32 %v353, %v382
    %v390 = vadd.f32 %v356, %v382
    %v391 = vadd.f32 %v359, %v382
    %v392 = vadd.f32 %v362, %v382
    %v393 = vadd.f32 %v365, %v382
    %v394 = vadd.f32 %v368, %v382
    %v395 = vadd.f32 %v371, %v382
    %v396 = vadd.f32 %v374, %v382
    %v397 = vadd.f32 %v377, %v382
    %v398 = vadd.f32 %v380, %v382
    %v399 = vxor.u32 %v383, 2147483648
    %v400 = vxor.u32 %v384, 2147483648
    %v401 = vxor.u32 %v385, 2147483648
    %v402 = vxor.u32 %v386, 2147483648
    %v403 = vxor.u32 %v387, 2147483648
    %v404 = vxor.u32 %v388, 2147483648
    %v405 = vxor.u32 %v389, 2147483648
    %v406 = vxor.u32 %v390, 2147483648
    %v407 = vxor.u32 %v391, 2147483648
    %v408 = vxor.u32 %v392, 2147483648
    %v409 = vxor.u32 %v393, 2147483648
    %v410 = vxor.u32 %v394, 2147483648
    %v411 = vxor.u32 %v395, 2147483648
    %v412 = vxor.u32 %v396, 2147483648
    %v413 = vxor.u32 %v397, 2147483648
    %v414 = vxor.u32 %v398, 2147483648
    %v415 = vmul.f32 %v399, 1.442695
    %v416 = vpow.pop %v415
    %v417 = vmul.f32 %v400, 1.442695
    %v418 = vpow.pop %v417
    %v419 = vmul.f32 %v401, 1.442695
    %v420 = vpow.pop %v419
    %v421 = vmul.f32 %v402, 1.442695
    %v422 = vpow.pop %v421
    %v423 = vmul.f32 %v403, 1.442695
    %v424 = vpow.pop %v423
    %v425 = vmul.f32 %v404, 1.442695
    %v426 = vpow.pop %v425
    %v427 = vmul.f32 %v405, 1.442695
    %v428 = vpow.pop %v427
    %v429 = vmul.f32 %v406, 1.442695
    %v430 = vpow.pop %v429
    %v431 = vmul.f32 %v407, 1.442695
    %v432 = vpow.pop %v431
    %v433 = vmul.f32 %v408, 1.442695
    %v434 = vpow.pop %v433
    %v435 = vmul.f32 %v409, 1.442695
    %v436 = vpow.pop %v435
    %v437 = vmul.f32 %v410, 1.442695
    %v438 = vpow.pop %v437
    %v439 = vmul.f32 %v411, 1.442695
    %v440 = vpow.pop %v439
    %v441 = vmul.f32 %v412, 1.442695
    %v442 = vpow.pop %v441
    %v443 = vmul.f32 %v413, 1.442695
    %v444 = vpow.pop %v443
    %v445 = vmul.f32 %v414, 1.442695
    %v446 = vpow.pop %v445
    %v447 = vadd.f32 %v416, 1.0
    %v448 = vadd.f32 %v418, 1.0
    %v449 = vadd.f32 %v420, 1.0
    %v450 = vadd.f32 %v422, 1.0
    %v451 = vadd.f32 %v424, 1.0
    %v452 = vadd.f32 %v426, 1.0
    %v453 = vadd.f32 %v428, 1.0
    %v454 = vadd.f32 %v430, 1.0
    %v455 = vadd.f32 %v432, 1.0
    %v456 = vadd.f32 %v434, 1.0
    %v457 = vadd.f32 %v436, 1.0
    %v458 = vadd.f32 %v438, 1.0
    %v459 = vadd.f32 %v440, 1.0
    %v460 = vadd.f32 %v442, 1.0
    %v461 = vadd.f32 %v444, 1.0
    %v462 = vadd.f32 %v446, 1.0
    %v463 = vrcp.pop %v447
    %v464 = vmul.f32 %v447, %v463
    %v465 = vsub.f32 1.0, %v464
    %v466 = vmul.f32 %v463, %v465
    %v467 = vadd.f32 %v463, %v466
    %vm468 = vweird.f32 %v447
    %vm469 = vweird.f32 %v463
    %vm470 = vmor %vm468, %vm469
    %v471 = vsel %vm470, %v463, %v467
    %v472 = vand.u32 2147483647, %v447
    %vm473 = vcmp.eq.f32.partialorder %v472, 8.507059e+37
    %v474 = vand.u32 %v447, 2147483648
    %v475 = vor.u32 1.1754944e-38, %v474
    %v476 = vsel %vm473, %v475, %v471
    %v477 = vmul.f32 1.0, %v476
    %v478 = vrcp.pop %v448
    %v479 = vmul.f32 %v448, %v478
    %v480 = vsub.f32 1.0, %v479
    %v481 = vmul.f32 %v478, %v480
    %v482 = vadd.f32 %v478, %v481
    %vm483 = vweird.f32 %v448
    %vm484 = vweird.f32 %v478
    %vm485 = vmor %vm483, %vm484
    %v486 = vsel %vm485, %v478, %v482
    %v487 = vand.u32 2147483647, %v448
    %vm488 = vcmp.eq.f32.partialorder %v487, 8.507059e+37
    %v489 = vand.u32 %v448, 2147483648
    %v490 = vor.u32 1.1754944e-38, %v489
    %v491 = vsel %vm488, %v490, %v486
    %v492 = vmul.f32 1.0, %v491
    %v493 = vrcp.pop %v449
    %v494 = vmul.f32 %v449, %v493
    %v495 = vsub.f32 1.0, %v494
    %v496 = vmul.f32 %v493, %v495
    %v497 = vadd.f32 %v493, %v496
    %vm498 = vweird.f32 %v449
    %vm499 = vweird.f32 %v493
    %vm500 = vmor %vm498, %vm499
    %v501 = vsel %vm500, %v493, %v497
    %v502 = vand.u32 2147483647, %v449
    %vm503 = vcmp.eq.f32.partialorder %v502, 8.507059e+37
    %v504 = vand.u32 %v449, 2147483648
    %v505 = vor.u32 1.1754944e-38, %v504
    %v506 = vsel %vm503, %v505, %v501
    %v507 = vmul.f32 1.0, %v506
    %v508 = vrcp.pop %v450
    %v509 = vmul.f32 %v450, %v508
    %v510 = vsub.f32 1.0, %v509
    %v511 = vmul.f32 %v508, %v510
    %v512 = vadd.f32 %v508, %v511
    %vm513 = vweird.f32 %v450
    %vm514 = vweird.f32 %v508
    %vm515 = vmor %vm513, %vm514
    %v516 = vsel %vm515, %v508, %v512
    %v517 = vand.u32 2147483647, %v450
    %vm518 = vcmp.eq.f32.partialorder %v517, 8.507059e+37
    %v519 = vand.u32 %v450, 2147483648
    %v520 = vor.u32 1.1754944e-38, %v519
    %v521 = vsel %vm518, %v520, %v516
    %v522 = vmul.f32 1.0, %v521
    %v523 = vrcp.pop %v451
    %v524 = vmul.f32 %v451, %v523
    %v525 = vsub.f32 1.0, %v524
    %v526 = vmul.f32 %v523, %v525
    %v527 = vadd.f32 %v523, %v526
    %vm528 = vweird.f32 %v451
    %vm529 = vweird.f32 %v523
    %vm530 = vmor %vm528, %vm529
    %v531 = vsel %vm530, %v523, %v527
    %v532 = vand.u32 2147483647, %v451
    %vm533 = vcmp.eq.f32.partialorder %v532, 8.507059e+37
    %v534 = vand.u32 %v451, 2147483648
    %v535 = vor.u32 1.1754944e-38, %v534
    %v536 = vsel %vm533, %v535, %v531
    %v537 = vmul.f32 1.0, %v536
    %v538 = vrcp.pop %v452
    %v539 = vmul.f32 %v452, %v538
    %v540 = vsub.f32 1.0, %v539
    %v541 = vmul.f32 %v538, %v540
    %v542 = vadd.f32 %v538, %v541
    %vm543 = vweird.f32 %v452
    %vm544 = vweird.f32 %v538
    %vm545 = vmor %vm543, %vm544
    %v546 = vsel %vm545, %v538, %v542
    %v547 = vand.u32 2147483647, %v452
    %vm548 = vcmp.eq.f32.partialorder %v547, 8.507059e+37
    %v549 = vand.u32 %v452, 2147483648
    %v550 = vor.u32 1.1754944e-38, %v549
    %v551 = vsel %vm548, %v550, %v546
    %v552 = vmul.f32 1.0, %v551
    %v553 = vrcp.pop %v453
    %v554 = vmul.f32 %v453, %v553
    %v555 = vsub.f32 1.0, %v554
    %v556 = vmul.f32 %v553, %v555
    %v557 = vadd.f32 %v553, %v556
    %vm558 = vweird.f32 %v453
    %vm559 = vweird.f32 %v553
    %vm560 = vmor %vm558, %vm559
    %v561 = vsel %vm560, %v553, %v557
    %v562 = vand.u32 2147483647, %v453
    %vm563 = vcmp.eq.f32.partialorder %v562, 8.507059e+37
    %v564 = vand.u32 %v453, 2147483648
    %v565 = vor.u32 1.1754944e-38, %v564
    %v566 = vsel %vm563, %v565, %v561
    %v567 = vmul.f32 1.0, %v566
    %v568 = vrcp.pop %v454
    %v569 = vmul.f32 %v454, %v568
    %v570 = vsub.f32 1.0, %v569
    %v571 = vmul.f32 %v568, %v570
    %v572 = vadd.f32 %v568, %v571
    %vm573 = vweird.f32 %v454
    %vm574 = vweird.f32 %v568
    %vm575 = vmor %vm573, %vm574
    %v576 = vsel %vm575, %v568, %v572
    %v577 = vand.u32 2147483647, %v454
    %vm578 = vcmp.eq.f32.partialorder %v577, 8.507059e+37
    %v579 = vand.u32 %v454, 2147483648
    %v580 = vor.u32 1.1754944e-38, %v579
    %v581 = vsel %vm578, %v580, %v576
    %v582 = vmul.f32 1.0, %v581
    %v583 = vrcp.pop %v455
    %v584 = vmul.f32 %v455, %v583
    %v585 = vsub.f32 1.0, %v584
    %v586 = vmul.f32 %v583, %v585
    %v587 = vadd.f32 %v583, %v586
    %vm588 = vweird.f32 %v455
    %vm589 = vweird.f32 %v583
    %vm590 = vmor %vm588, %vm589
    %v591 = vsel %vm590, %v583, %v587
    %v592 = vand.u32 2147483647, %v455
    %vm593 = vcmp.eq.f32.partialorder %v592, 8.507059e+37
    %v594 = vand.u32 %v455, 2147483648
    %v595 = vor.u32 1.1754944e-38, %v594
    %v596 = vsel %vm593, %v595, %v591
    %v597 = vmul.f32 1.0, %v596
    %v598 = vrcp.pop %v456
    %v599 = vmul.f32 %v456, %v598
    %v600 = vsub.f32 1.0, %v599
    %v601 = vmul.f32 %v598, %v600
    %v602 = vadd.f32 %v598, %v601
    %vm603 = vweird.f32 %v456
    %vm604 = vweird.f32 %v598
    %vm605 = vmor %vm603, %vm604
    %v606 = vsel %vm605, %v598, %v602
    %v607 = vand.u32 2147483647, %v456
    %vm608 = vcmp.eq.f32.partialorder %v607, 8.507059e+37
    %v609 = vand.u32 %v456, 2147483648
    %v610 = vor.u32 1.1754944e-38, %v609
    %v611 = vsel %vm608, %v610, %v606
    %v612 = vmul.f32 1.0, %v611
    %v613 = vrcp.pop %v457
    %v614 = vmul.f32 %v457, %v613
    %v615 = vsub.f32 1.0, %v614
    %v616 = vmul.f32 %v613, %v615
    %v617 = vadd.f32 %v613, %v616
    %vm618 = vweird.f32 %v457
    %vm619 = vweird.f32 %v613
    %vm620 = vmor %vm618, %vm619
    %v621 = vsel %vm620, %v613, %v617
    %v622 = vand.u32 2147483647, %v457
    %vm623 = vcmp.eq.f32.partialorder %v622, 8.507059e+37
    %v624 = vand.u32 %v457, 2147483648
    %v625 = vor.u32 1.1754944e-38, %v624
    %v626 = vsel %vm623, %v625, %v621
    %v627 = vmul.f32 1.0, %v626
    %v628 = vrcp.pop %v458
    %v629 = vmul.f32 %v458, %v628
    %v630 = vsub.f32 1.0, %v629
    %v631 = vmul.f32 %v628, %v630
    %v632 = vadd.f32 %v628, %v631
    %vm633 = vweird.f32 %v458
    %vm634 = vweird.f32 %v628
    %vm635 = vmor %vm633, %vm634
    %v636 = vsel %vm635, %v628, %v632
    %v637 = vand.u32 2147483647, %v458
    %vm638 = vcmp.eq.f32.partialorder %v637, 8.507059e+37
    %v639 = vand.u32 %v458, 2147483648
    %v640 = vor.u32 1.1754944e-38, %v639
    %v641 = vsel %vm638, %v640, %v636
    %v642 = vmul.f32 1.0, %v641
    %v643 = vrcp.pop %v459
    %v644 = vmul.f32 %v459, %v643
    %v645 = vsub.f32 1.0, %v644
    %v646 = vmul.f32 %v643, %v645
    %v647 = vadd.f32 %v643, %v646
    %vm648 = vweird.f32 %v459
    %vm649 = vweird.f32 %v643
    %vm650 = vmor %vm648, %vm649
    %v651 = vsel %vm650, %v643, %v647
    %v652 = vand.u32 2147483647, %v459
    %vm653 = vcmp.eq.f32.partialorder %v652, 8.507059e+37
    %v654 = vand.u32 %v459, 2147483648
    %v655 = vor.u32 1.1754944e-38, %v654
    %v656 = vsel %vm653, %v655, %v651
    %v657 = vmul.f32 1.0, %v656
    %v658 = vrcp.pop %v460
    %v659 = vmul.f32 %v460, %v658
    %v660 = vsub.f32 1.0, %v659
    %v661 = vmul.f32 %v658, %v660
    %v662 = vadd.f32 %v658, %v661
    %vm663 = vweird.f32 %v460
    %vm664 = vweird.f32 %v658
    %vm665 = vmor %vm663, %vm664
    %v666 = vsel %vm665, %v658, %v662
    %v667 = vand.u32 2147483647, %v460
    %vm668 = vcmp.eq.f32.partialorder %v667, 8.507059e+37
    %v669 = vand.u32 %v460, 2147483648
    %v670 = vor.u32 1.1754944e-38, %v669
    %v671 = vsel %vm668, %v670, %v666
    %v672 = vmul.f32 1.0, %v671
    %v673 = vrcp.pop %v461
    %v674 = vmul.f32 %v461, %v673
    %v675 = vsub.f32 1.0, %v674
    %v676 = vmul.f32 %v673, %v675
    %v677 = vadd.f32 %v673, %v676
    %vm678 = vweird.f32 %v461
    %vm679 = vweird.f32 %v673
    %vm680 = vmor %vm678, %vm679
    %v681 = vsel %vm680, %v673, %v677
    %v682 = vand.u32 2147483647, %v461
    %vm683 = vcmp.eq.f32.partialorder %v682, 8.507059e+37
    %v684 = vand.u32 %v461, 2147483648
    %v685 = vor.u32 1.1754944e-38, %v684
    %v686 = vsel %vm683, %v685, %v681
    %v687 = vmul.f32 1.0, %v686
    %v688 = vrcp.pop %v462
    %v689 = vmul.f32 %v462, %v688
    %v690 = vsub.f32 1.0, %v689
    %v691 = vmul.f32 %v688, %v690
    %v692 = vadd.f32 %v688, %v691
    %vm693 = vweird.f32 %v462
    %vm694 = vweird.f32 %v688
    %vm695 = vmor %vm693, %vm694
    %v696 = vsel %vm695, %v688, %v692
    %v697 = vand.u32 2147483647, %v462
    %vm698 = vcmp.eq.f32.partialorder %v697, 8.507059e+37
    %v699 = vand.u32 %v462, 2147483648
    %v700 = vor.u32 1.1754944e-38, %v699
    %v701 = vsel %vm698, %v700, %v696
    %v702 = vmul.f32 1.0, %v701
    %v719 = vlaneseq
    %v720 = vand.u32 %v719, 127
    %v721 = vperm.slane %v477, %v720
    %v722 = vadd.s32 %v720, 4294967288
    %v723 = vperm.slane %v492, %v722
    %vm724 = vcmask 130112
    %v725 = vsel %vm724, %v723, %v721
    %v726 = vadd.s32 %v720, 4294967280
    %v727 = vperm.slane %v507, %v726
    %vm728 = vcmask 195712
    %v729 = vsel %vm728, %v727, %v725
    %v730 = vadd.s32 %v720, 4294967272
    %v731 = vperm.slane %v522, %v730
    %vm732 = vcmask 261312
    %v733 = vsel %vm732, %v731, %v729
    %v734 = vadd.s32 %v720, 4294967264
    %v735 = vperm.slane %v537, %v734
    %vm736 = vcmask 326912
    %v737 = vsel %vm736, %v735, %v733
    %v738 = vadd.s32 %v720, 4294967256
    %v739 = vperm.slane %v552, %v738
    %vm740 = vcmask 392512
    %v741 = vsel %vm740, %v739, %v737
    %v742 = vadd.s32 %v720, 4294967248
    %v743 = vperm.slane %v567, %v742
    %vm744 = vcmask 458112
    %v745 = vsel %vm744, %v743, %v741
    %v746 = vadd.s32 %v720, 4294967240
    %v747 = vperm.slane %v582, %v746
    %vm748 = vcmask 523712
    %v749 = vsel %vm748, %v747, %v745
    %v750 = vadd.s32 %v720, 4294967232
    %v751 = vperm.slane %v597, %v750
    %vm752 = vcmask 589312
    %v753 = vsel %vm752, %v751, %v749
    %v754 = vadd.s32 %v720, 4294967224
    %v755 = vperm.slane %v612, %v754
    %vm756 = vcmask 654912
    %v757 = vsel %vm756, %v755, %v753
    %v758 = vadd.s32 %v720, 4294967216
    %v759 = vperm.slane %v627, %v758
    %vm760 = vcmask 720512
    %v761 = vsel %vm760, %v759, %v757
    %v762 = vadd.s32 %v720, 4294967208
    %v763 = vperm.slane %v642, %v762
    %vm764 = vcmask 786112
    %v765 = vsel %vm764, %v763, %v761
    %v766 = vadd.s32 %v720, 4294967200
    %v767 = vperm.slane %v657, %v766
    %vm768 = vcmask 851712
    %v769 = vsel %vm768, %v767, %v765
    %v770 = vadd.s32 %v720, 4294967192
    %v771 = vperm.slane %v672, %v770
    %vm772 = vcmask 917312
    %v773 = vsel %vm772, %v771, %v769
    %v774 = vadd.s32 %v720, 4294967184
    %v775 = vperm.slane %v687, %v774
    %vm776 = vcmask 982912
    %v777 = vsel %vm776, %v775, %v773
    %v778 = vadd.s32 %v720, 4294967176
    %v779 = vperm.slane %v702, %v778
    %vm780 = vcmask 1048512
    %v781 = vsel %vm780, %v779, %v777
    %783 = vst [vmem:[#allocation3] sm:$0x1] %v781
    // Predicated region
    $region30: #{tpu_custom_call.1} parent=1 // pred_check
      _
    $region31: #{tpu_custom_call.1} parent=1 // pred_check_branch
      %785 = sbr.rel (0) target = $region33
    $region32: #{tpu_custom_call.1} parent=1 // pred_region
      %787 = vsyncadd [#allocation4], 0
      %s789 = sshll.u32 [#allocation3], 4
      %s790 = int_to_ptr.vmem [resolvable:$true] %s789
      %s791 = sshll.u32 %s7, 4
      %s792 = int_to_ptr.hbm [resolvable:$true] %s791
      %794 = dma.vmem_to_hbm [thread:$0]  %s790, 16, %s792, [#allocation4]
    $region33: #{tpu_custom_call.1} parent=1 // pred_fallthru
      _
    // Predicated region
    $region34: #{tpu_custom_call.1} parent=1 // pred_check
      _
    $region35: #{tpu_custom_call.1} parent=1 // pred_check_branch
      %796 = sbr.rel (0) target = $region37
    $region36: #{tpu_custom_call.1} parent=1 // pred_region
      %798 = dma.done [#allocation4], 16
    $region37: #{tpu_custom_call.1} parent=1 // pred_fallthru
      _
    %799 = vsyncpa [#allocation4], 1

</llo_original>
